<compile_context>
chip_gen: v7x
topology: tpu7x:2x2x1
jax: 0.10.0
libtpu: 0.0.40
codegen_flags: <defaults>
</compile_context>

<pallas_src>
import functools
import math

import jax
import jax.numpy as jnp
from jax import lax
from jax.experimental import pallas as pl
from jax.experimental.pallas import tpu as pltpu


def _dc_ce_kernel(x_ref, y_ref, inter_ref, pred_ref, gt_ref, ce_ref, *,
                  n_valid, n_inner, tile_n, ragged):
    o = pl.program_id(0)                  # outer ("parallel") axis
    t = pl.program_id(1)                  # inner reduction ("arbitrary") axis

    @pl.when(t == 0)
    def _init():
        inter_ref[...] = jnp.zeros_like(inter_ref)
        pred_ref[...] = jnp.zeros_like(pred_ref)
        gt_ref[...] = jnp.zeros_like(gt_ref)
        ce_ref[...] = jnp.zeros_like(ce_ref)

    x = x_ref[...].astype(jnp.float32)    # (B, C, TN) logits (bf16 inputs ok)
    y = y_ref[...].astype(jnp.int32)      # (B, TN) labels (int8 in HBM)
    B, C, TN = x.shape

    # numerically-stable softmax over the channel (sublane) axis.
    m = jnp.max(x, axis=1, keepdims=True)             # (B, 1, TN)
    e = jnp.exp(x - m)                                # (B, C, TN)  EUP
    s = jnp.sum(e, axis=1, keepdims=True)             # (B, 1, TN)
    inv_s = pl.reciprocal(s, approx=True)             # EUP slot (free-ish)
    inv_s = inv_s * (2.0 - s * inv_s)                 # one Newton step, ~f32 acc.
    p = e * inv_s                                     # (B, C, TN) softmax probs

    # bool one-hot mask: labels vs a tiny per-channel iota (no f32 onehot).
    cls = lax.broadcasted_iota(jnp.int32, (1, C, 1), 1)
    mask = cls == y[:, None, :]                       # (B, C, TN) bool

    if ragged:
        # mask out the out-of-range lanes of the (partial) last tile.
        lane = lax.broadcasted_iota(jnp.int32, (1, 1, TN), 2)
        start = (o * n_inner + t) * tile_n
        valid = (start + lane) < n_valid              # (1, 1, TN) bool
        mask = jnp.logical_and(mask, valid)
        p = jnp.where(valid, p, 0.0)

    # cross-entropy per pixel: -log p[target] = m + log(s) - x[target]
    x_tgt = jnp.sum(jnp.where(mask, x, 0.0), axis=1)  # (B, TN)
    ce_pix = m[:, 0, :] + jnp.log(s[:, 0, :]) - x_tgt
    if ragged:
        ce_pix = jnp.where(valid[:, 0, :], ce_pix, 0.0)

    # dice statistics: keepdims lane-reductions -> (B, C, 1), accumulated into
    # the resident (1, B, C, 1) blocks (no C->lane relayout).
    inter_ref[...] += jnp.sum(jnp.where(mask, p, 0.0), axis=2, keepdims=True)[None]
    pred_ref[...] += jnp.sum(p, axis=2, keepdims=True)[None]
    gt_ref[...] += jnp.sum(jnp.where(mask, 1.0, 0.0), axis=2, keepdims=True)[None]

    # lane-wide CE partials; the scalar collapse happens once in the wrapper.
    ce_ref[...] += ce_pix[None]


def _pick_tile_n(N, B, C, x_itemsize, y_itemsize, max_tile_n,
                 vmem_budget_bytes=24 * 1024 * 1024):
    """Largest lane tile (multiple of 128) whose working set fits the budget.

    Counts double-buffered input blocks, the resident CE partial block and
    ~6 live f32 (B, C, tile_n) temporaries inside the kernel body, so the
    choice is safe on v7x's 64 MiB VMEM as well as v5e/v6e's 128 MiB.
    """
    per_col = (2 * (B * C * x_itemsize + B * y_itemsize)   # double-buffered inputs
               + B * 4                                      # resident CE block
               + 6 * B * C * 4)                             # live f32 temporaries
    cap = max(128, (vmem_budget_bytes // per_col) // 128 * 128)
    n_up = -(-N // 128) * 128
    tile = min(cap, max_tile_n, n_up)
    return max(128, tile // 128 * 128)


def _split_grid(N, tile_n):
    """Return (tile_n, n_outer, n_inner) with n_outer*n_inner == ceil(N/tile_n).

    Prefers an even tile count so the outer "parallel" axis can split the
    spatial reduction across both v7x TensorCores; falls back to a single
    outer program (harmless on single-core v5e/v6e).
    """
    def n_tiles(t):
        return -(-N // t)

    nt = n_tiles(tile_n)
    if nt <= 1:
        return tile_n, 1, 1
    if nt % 2 == 0:
        return tile_n, 2, nt // 2
    t = tile_n - 128
    for _ in range(64):                   # bounded search for an even split
        if t < 512:
            break
        if n_tiles(t) % 2 == 0:
            return t, 2, n_tiles(t) // 2
        t -= 128
    return tile_n, 1, nt


def dc_and_ce_loss(logits, target, *,
                   weight_ce=1.0, weight_dice=1.0,
                   smooth=1.0, batch_dice=False, do_bg=True,
                   max_tile_n=32768):
    B, C = logits.shape[0], logits.shape[1]
    N = int(math.prod(logits.shape[2:]))
    assert int(math.prod(target.shape)) == B * N, \
        "target must be (B, 1, *spatial) or (B, *spatial)"

    # Keep the logits dtype (bf16 halves HBM traffic); upcast inside the kernel.
    x = logits.reshape(B, C, N)
    # Narrow integer labels: ~4x less label DMA than int32.
    y_dtype = jnp.int8 if C <= 127 else jnp.int32
    y = target.reshape(B, N).astype(y_dtype)

    tile_n = _pick_tile_n(N, B, C, x.dtype.itemsize, y.dtype.itemsize, max_tile_n)
    tile_n, n_outer, n_inner = _split_grid(N, tile_n)
    ragged = n_outer * n_inner * tile_n != N   # last tile partially valid

    kernel = functools.partial(_dc_ce_kernel, n_valid=N, n_inner=n_inner,
                               tile_n=tile_n, ragged=ragged)

    out_shapes = (
        jax.ShapeDtypeStruct((n_outer, B, C, 1), jnp.float32),       # intersect
        jax.ShapeDtypeStruct((n_outer, B, C, 1), jnp.float32),       # sum_pred
        jax.ShapeDtypeStruct((n_outer, B, C, 1), jnp.float32),       # sum_gt
        jax.ShapeDtypeStruct((n_outer, B, tile_n), jnp.float32),     # CE partials
    )
    dice_spec = pl.BlockSpec((1, B, C, 1), lambda o, t: (o, 0, 0, 0))
    out_specs = (
        dice_spec, dice_spec, dice_spec,
        pl.BlockSpec((1, B, tile_n), lambda o, t: (o, 0, 0)),
    )
    in_specs = [
        pl.BlockSpec((B, C, tile_n), lambda o, t: (0, 0, o * n_inner + t)),
        pl.BlockSpec((B, tile_n), lambda o, t: (0, o * n_inner + t)),
    ]

    inter, pred, gt, ce = pl.pallas_call(
        kernel,
        out_shape=out_shapes,
        grid_spec=pltpu.PrefetchScalarGridSpec(
            num_scalar_prefetch=0,
            grid=(n_outer, n_inner),
            in_specs=in_specs,
            out_specs=out_specs,
        ),
        compiler_params=pltpu.CompilerParams(
            dimension_semantics=("parallel", "arbitrary"),
            vmem_limit_bytes=48 * 1024 * 1024,
        ),
    )(x, y)

    # Tiny final combine in plain JAX (per-core / per-outer partials -> loss).
    # NOTE: dice sums / CE partials accumulate in f32; for N >~ 1e8 voxels
    # consider more partial buckets.
    inter = inter.sum(0)[..., 0]
    pred = pred.sum(0)[..., 0]
    gt = gt.sum(0)[..., 0]
    if not do_bg:
        inter, pred, gt = inter[:, 1:], pred[:, 1:], gt[:, 1:]
    if batch_dice:
        inter, pred, gt = inter.sum(0), pred.sum(0), gt.sum(0)
    dc = (2.0 * inter + smooth) / jnp.maximum(gt + pred + smooth, 1e-8)
    dc_loss = -jnp.mean(dc)
    ce_loss = ce.sum() / float(B * N)
    return weight_ce * ce_loss + weight_dice * dc_loss


def reference_loss(logits, target, *, weight_ce=1.0, weight_dice=1.0,
                   smooth=1.0, batch_dice=False, do_bg=True):
    """Pure-JAX replica of DC_and_CE_loss.forward (ignore_label=None)."""
    B, C = logits.shape[:2]
    y = target.reshape(B, *logits.shape[2:]).astype(jnp.int32)
    xf = logits.astype(jnp.float32)
    x = jax.nn.softmax(xf, axis=1)
    onehot = jax.nn.one_hot(y, C, axis=1, dtype=jnp.float32)
    xs, oh = (x, onehot) if do_bg else (x[:, 1:], onehot[:, 1:])
    axes = tuple(range(2, logits.ndim))
    inter = jnp.sum(xs * oh, axes)
    sp = jnp.sum(xs, axes)
    sg = jnp.sum(oh, axes)
    if batch_dice:
        inter, sp, sg = inter.sum(0), sp.sum(0), sg.sum(0)
    dc = (2.0 * inter + smooth) / jnp.maximum(sg + sp + smooth, 1e-8)
    dc_loss = -jnp.mean(dc)
    log_p = jax.nn.log_softmax(xf, axis=1)
    ce = -jnp.mean(jnp.sum(onehot * log_p, axis=1))
    return weight_ce * ce + weight_dice * dc_loss


if __name__ == "__main__":
    key = jax.random.PRNGKey(0)
    tol = dict(rtol=1e-4, atol=1e-4)   # approx-recip + Newton keeps ~f32 accuracy

    # Case 1: small shape from the module spec (single tile, grid (1,1)).
    B, C, H, W = 2, 4, 16, 16
    k1, k2, k3, k4 = jax.random.split(key, 4)
    logits = jax.random.normal(k1, (B, C, H, W), dtype=jnp.float32)
    target = jax.random.randint(k2, (B, 1, H, W), 0, C, dtype=jnp.int32)
    loss = jax.block_until_ready(dc_and_ce_loss(logits, target))
    ref = jax.block_until_ready(reference_loss(logits, target))
    assert jnp.allclose(loss, ref, **tol), (loss, ref)

    # Case 2: multi-tile path with an even tile count (outer "parallel" split).
    B2, C2, H2, W2 = 2, 4, 32, 32
    logits2 = jax.random.normal(k3, (B2, C2, H2, W2), dtype=jnp.float32)
    target2 = jax.random.randint(k4, (B2, 1, H2, W2), 0, C2, dtype=jnp.int32)
    loss2 = jax.block_until_ready(dc_and_ce_loss(logits2, target2, max_tile_n=512))
    ref2 = jax.block_until_ready(reference_loss(logits2, target2))
    assert jnp.allclose(loss2, ref2, **tol), (loss2, ref2)

    # Case 3: bf16 logits (the intended low-HBM-traffic path).
    logits2b = logits2.astype(jnp.bfloat16)
    loss2b = jax.block_until_ready(dc_and_ce_loss(logits2b, target2, max_tile_n=512))
    ref2b = jax.block_until_ready(reference_loss(logits2b, target2))
    assert jnp.allclose(loss2b, ref2b, **tol), (loss2b, ref2b)

    # Case 4: awkward N (24*24=576, not a multiple of tile), ragged last tile.
    k5, k6 = jax.random.split(k4)
    B3, C3, H3, W3 = 2, 3, 24, 24
    logits3 = jax.random.normal(k5, (B3, C3, H3, W3), dtype=jnp.float32)
    target3 = jax.random.randint(k6, (B3, 1, H3, W3), 0, C3, dtype=jnp.int32)
    loss3 = jax.block_until_ready(dc_and_ce_loss(logits3, target3, max_tile_n=256))
    ref3 = jax.block_until_ready(reference_loss(logits3, target3))
    assert jnp.allclose(loss3, ref3, **tol), (loss3, ref3)

    print("KERNEL_OK")
</pallas_src>

<mosaic_0001>
module attributes {stable_mosaic.version = 11 : i64} {
  func.func @_dc_ce_kernel(%arg0: i32, %arg1: i32, %arg2: memref<2x4x256xf32, #tpu.memory_space<vmem>>, %arg3: memref<2x256xi8, #tpu.memory_space<vmem>>, %arg4: memref<1x2x4x1xf32, #tpu.memory_space<vmem>>, %arg5: memref<1x2x4x1xf32, #tpu.memory_space<vmem>>, %arg6: memref<1x2x4x1xf32, #tpu.memory_space<vmem>>, %arg7: memref<1x2x256xf32, #tpu.memory_space<vmem>>) attributes {dimension_semantics = [#tpu.dimension_semantics<parallel>, #tpu.dimension_semantics<arbitrary>], iteration_bounds = array<i64: 1, 1>, scalar_prefetch = 0 : i64, scratch_operands = 0 : i64, tpu.core_type = #tpu.core_type<tc>, window_params = [{transform_indices = @transform_0, window_bounds = array<i64: 2, 4, 256>}, {transform_indices = @transform_1, window_bounds = array<i64: 2, 256>}, {transform_indices = @transform_2, window_bounds = array<i64: 1, 2, 4, 1>}, {transform_indices = @transform_3, window_bounds = array<i64: 1, 2, 4, 1>}, {transform_indices = @transform_4, window_bounds = array<i64: 1, 2, 4, 1>}, {transform_indices = @transform_5, window_bounds = array<i64: 1, 2, 256>}]} {
    %c0_i32 = arith.constant 0 : i32
    %0 = arith.cmpi eq, %arg1, %c0_i32 : i32
    %1 = arith.extui %0 : i1 to i32
    %c0_i32_0 = arith.constant 0 : i32
    %2 = arith.cmpi ne, %1, %c0_i32_0 : i32
    scf.if %2 {
      %cst_45 = arith.constant 0.000000e+00 : f32
      %60 = vector.broadcast %cst_45 : f32 to vector<1x2x4x1xf32>
      %c0_46 = arith.constant 0 : index
      %c0_47 = arith.constant 0 : index
      %c0_48 = arith.constant 0 : index
      %c0_49 = arith.constant 0 : index
      %61 = vector.load %arg4[%c0_46, %c0_47, %c0_48, %c0_49] : memref<1x2x4x1xf32, #tpu.memory_space<vmem>>, vector<1x2x4x1xf32>
      tpu.vector_store %arg4[%c0_46, %c0_47, %c0_48, %c0_49], %60 {strides = array<i32>} : memref<1x2x4x1xf32, #tpu.memory_space<vmem>>, vector<1x2x4x1xf32>,
      %cst_50 = arith.constant 0.000000e+00 : f32
      %62 = vector.broadcast %cst_50 : f32 to vector<1x2x4x1xf32>
      %c0_51 = arith.constant 0 : index
      %c0_52 = arith.constant 0 : index
      %c0_53 = arith.constant 0 : index
      %c0_54 = arith.constant 0 : index
      %63 = vector.load %arg5[%c0_51, %c0_52, %c0_53, %c0_54] : memref<1x2x4x1xf32, #tpu.memory_space<vmem>>, vector<1x2x4x1xf32>
      tpu.vector_store %arg5[%c0_51, %c0_52, %c0_53, %c0_54], %62 {strides = array<i32>} : memref<1x2x4x1xf32, #tpu.memory_space<vmem>>, vector<1x2x4x1xf32>,
      %cst_55 = arith.constant 0.000000e+00 : f32
      %64 = vector.broadcast %cst_55 : f32 to vector<1x2x4x1xf32>
      %c0_56 = arith.constant 0 : index
      %c0_57 = arith.constant 0 : index
      %c0_58 = arith.constant 0 : index
      %c0_59 = arith.constant 0 : index
      %65 = vector.load %arg6[%c0_56, %c0_57, %c0_58, %c0_59] : memref<1x2x4x1xf32, #tpu.memory_space<vmem>>, vector<1x2x4x1xf32>
      tpu.vector_store %arg6[%c0_56, %c0_57, %c0_58, %c0_59], %64 {strides = array<i32>} : memref<1x2x4x1xf32, #tpu.memory_space<vmem>>, vector<1x2x4x1xf32>,
      %cst_60 = arith.constant 0.000000e+00 : f32
      %66 = vector.broadcast %cst_60 : f32 to vector<1x2x256xf32>
      %c0_61 = arith.constant 0 : index
      %c0_62 = arith.constant 0 : index
      %c0_63 = arith.constant 0 : index
      %67 = vector.load %arg7[%c0_61, %c0_62, %c0_63] : memref<1x2x256xf32, #tpu.memory_space<vmem>>, vector<1x2x256xf32>
      tpu.vector_store %arg7[%c0_61, %c0_62, %c0_63], %66 {strides = array<i32>} : memref<1x2x256xf32, #tpu.memory_space<vmem>>, vector<1x2x256xf32>,
    } else {
    }
    %c0 = arith.constant 0 : index
    %c0_1 = arith.constant 0 : index
    %c0_2 = arith.constant 0 : index
    %3 = vector.load %arg2[%c0, %c0_1, %c0_2] : memref<2x4x256xf32, #tpu.memory_space<vmem>>, vector<2x4x256xf32>
    %c0_3 = arith.constant 0 : index
    %c0_4 = arith.constant 0 : index
    %4 = vector.load %arg3[%c0_3, %c0_4] : memref<2x256xi8, #tpu.memory_space<vmem>>, vector<2x256xi8>
    %5 = arith.extsi %4 : vector<2x256xi8> to vector<2x256xi32>
    %cst = arith.constant dense<0xFF800000> : vector<2x256xf32>
    %6 = vector.multi_reduction <maximumf>, %3, %cst [1] : vector<2x4x256xf32> to vector<2x256xf32>
    %7 = vector.shape_cast %6 : vector<2x256xf32> to vector<2x1x256xf32>
    %8 = vector.broadcast %7 : vector<2x1x256xf32> to vector<2x4x256xf32>
    %9 = arith.subf %3, %8 : vector<2x4x256xf32>
    %10 = math.exp %9 : vector<2x4x256xf32>
    %cst_5 = arith.constant dense<0.000000e+00> : vector<2x256xf32>
    %11 = vector.multi_reduction <add>, %10, %cst_5 [1] : vector<2x4x256xf32> to vector<2x256xf32>
    %12 = vector.shape_cast %11 : vector<2x256xf32> to vector<2x1x256xf32>
    %13 = tpu.reciprocal %12 {approx = true} : vector<2x1x256xf32> -> vector<2x1x256xf32>
    %14 = arith.mulf %12, %13 : vector<2x1x256xf32>
    %cst_6 = arith.constant 2.000000e+00 : f32
    %15 = vector.broadcast %cst_6 : f32 to vector<2x1x256xf32>
    %16 = arith.subf %15, %14 : vector<2x1x256xf32>
    %17 = arith.mulf %13, %16 : vector<2x1x256xf32>
    %18 = vector.broadcast %17 : vector<2x1x256xf32> to vector<2x4x256xf32>
    %19 = arith.mulf %10, %18 : vector<2x4x256xf32>
    %20 = tpu.iota {dimensions = array<i32: 1>} : vector<1x4x1xi32>
    %21 = vector.shape_cast %5 : vector<2x256xi32> to vector<2x1x256xi32>
    %22 = vector.broadcast %20 : vector<1x4x1xi32> to vector<2x4x256xi32>
    %23 = vector.broadcast %21 : vector<2x1x256xi32> to vector<2x4x256xi32>
    %24 = arith.cmpi eq, %22, %23 : vector<2x4x256xi32>
    %cst_7 = arith.constant 0.000000e+00 : f32
    %25 = vector.broadcast %cst_7 : f32 to vector<2x4x256xf32>
    %26 = arith.select %24, %3, %25 : vector<2x4x256xi1>, vector<2x4x256xf32>
    %cst_8 = arith.constant dense<0.000000e+00> : vector<2x256xf32>
    %27 = vector.multi_reduction <add>, %26, %cst_8 [1] : vector<2x4x256xf32> to vector<2x256xf32>
    %28 = vector.shape_cast %7 : vector<2x1x256xf32> to vector<2x256xf32>
    %29 = vector.shape_cast %12 : vector<2x1x256xf32> to vector<2x256xf32>
    %30 = math.log %29 : vector<2x256xf32>
    %31 = arith.addf %28, %30 : vector<2x256xf32>
    %32 = arith.subf %31, %27 : vector<2x256xf32>
    %c0_9 = arith.constant 0 : index
    %c0_10 = arith.constant 0 : index
    %c0_11 = arith.constant 0 : index
    %c0_12 = arith.constant 0 : index
    %33 = vector.load %arg4[%c0_9, %c0_10, %c0_11, %c0_12] : memref<1x2x4x1xf32, #tpu.memory_space<vmem>>, vector<1x2x4x1xf32>
    %cst_13 = arith.constant 0.000000e+00 : f32
    %34 = vector.broadcast %cst_13 : f32 to vector<2x4x256xf32>
    %35 = arith.select %24, %19, %34 : vector<2x4x256xi1>, vector<2x4x256xf32>
    %cst_14 = arith.constant dense<0.000000e+00> : vector<2x4xf32>
    %36 = vector.multi_reduction <add>, %35, %cst_14 [2] : vector<2x4x256xf32> to vector<2x4xf32>
    %37 = vector.shape_cast %36 : vector<2x4xf32> to vector<2x4x1xf32>
    %38 = vector.shape_cast %37 : vector<2x4x1xf32> to vector<1x2x4x1xf32>
    %39 = arith.addf %33, %38 : vector<1x2x4x1xf32>
    %c0_15 = arith.constant 0 : index
    %c0_16 = arith.constant 0 : index
    %c0_17 = arith.constant 0 : index
    %c0_18 = arith.constant 0 : index
    %40 = vector.load %arg4[%c0_15, %c0_16, %c0_17, %c0_18] : memref<1x2x4x1xf32, #tpu.memory_space<vmem>>, vector<1x2x4x1xf32>
    tpu.vector_store %arg4[%c0_15, %c0_16, %c0_17, %c0_18], %39 {strides = array<i32>} : memref<1x2x4x1xf32, #tpu.memory_space<vmem>>, vector<1x2x4x1xf32>,
    %c0_19 = arith.constant 0 : index
    %c0_20 = arith.constant 0 : index
    %c0_21 = arith.constant 0 : index
    %c0_22 = arith.constant 0 : index
    %41 = vector.load %arg5[%c0_19, %c0_20, %c0_21, %c0_22] : memref<1x2x4x1xf32, #tpu.memory_space<vmem>>, vector<1x2x4x1xf32>
    %cst_23 = arith.constant dense<0.000000e+00> : vector<2x4xf32>
    %42 = vector.multi_reduction <add>, %19, %cst_23 [2] : vector<2x4x256xf32> to vector<2x4xf32>
    %43 = vector.shape_cast %42 : vector<2x4xf32> to vector<2x4x1xf32>
    %44 = vector.shape_cast %43 : vector<2x4x1xf32> to vector<1x2x4x1xf32>
    %45 = arith.addf %41, %44 : vector<1x2x4x1xf32>
    %c0_24 = arith.constant 0 : index
    %c0_25 = arith.constant 0 : index
    %c0_26 = arith.constant 0 : index
    %c0_27 = arith.constant 0 : index
    %46 = vector.load %arg5[%c0_24, %c0_25, %c0_26, %c0_27] : memref<1x2x4x1xf32, #tpu.memory_space<vmem>>, vector<1x2x4x1xf32>
    tpu.vector_store %arg5[%c0_24, %c0_25, %c0_26, %c0_27], %45 {strides = array<i32>} : memref<1x2x4x1xf32, #tpu.memory_space<vmem>>, vector<1x2x4x1xf32>,
    %c0_28 = arith.constant 0 : index
    %c0_29 = arith.constant 0 : index
    %c0_30 = arith.constant 0 : index
    %c0_31 = arith.constant 0 : index
    %47 = vector.load %arg6[%c0_28, %c0_29, %c0_30, %c0_31] : memref<1x2x4x1xf32, #tpu.memory_space<vmem>>, vector<1x2x4x1xf32>
    %cst_32 = arith.constant 1.000000e+00 : f32
    %cst_33 = arith.constant 0.000000e+00 : f32
    %48 = vector.broadcast %cst_32 : f32 to vector<2x4x256xf32>
    %49 = vector.broadcast %cst_33 : f32 to vector<2x4x256xf32>
    %50 = arith.select %24, %48, %49 : vector<2x4x256xi1>, vector<2x4x256xf32>
    %cst_34 = arith.constant dense<0.000000e+00> : vector<2x4xf32>
    %51 = vector.multi_reduction <add>, %50, %cst_34 [2] : vector<2x4x256xf32> to vector<2x4xf32>
    %52 = vector.shape_cast %51 : vector<2x4xf32> to vector<2x4x1xf32>
    %53 = vector.shape_cast %52 : vector<2x4x1xf32> to vector<1x2x4x1xf32>
    %54 = arith.addf %47, %53 : vector<1x2x4x1xf32>
    %c0_35 = arith.constant 0 : index
    %c0_36 = arith.constant 0 : index
    %c0_37 = arith.constant 0 : index
    %c0_38 = arith.constant 0 : index
    %55 = vector.load %arg6[%c0_35, %c0_36, %c0_37, %c0_38] : memref<1x2x4x1xf32, #tpu.memory_space<vmem>>, vector<1x2x4x1xf32>
    tpu.vector_store %arg6[%c0_35, %c0_36, %c0_37, %c0_38], %54 {strides = array<i32>} : memref<1x2x4x1xf32, #tpu.memory_space<vmem>>, vector<1x2x4x1xf32>,
    %c0_39 = arith.constant 0 : index
    %c0_40 = arith.constant 0 : index
    %c0_41 = arith.constant 0 : index
    %56 = vector.load %arg7[%c0_39, %c0_40, %c0_41] : memref<1x2x256xf32, #tpu.memory_space<vmem>>, vector<1x2x256xf32>
    %57 = vector.shape_cast %32 : vector<2x256xf32> to vector<1x2x256xf32>
    %58 = arith.addf %56, %57 : vector<1x2x256xf32>
    %c0_42 = arith.constant 0 : index
    %c0_43 = arith.constant 0 : index
    %c0_44 = arith.constant 0 : index
    %59 = vector.load %arg7[%c0_42, %c0_43, %c0_44] : memref<1x2x256xf32, #tpu.memory_space<vmem>>, vector<1x2x256xf32>
    tpu.vector_store %arg7[%c0_42, %c0_43, %c0_44], %58 {strides = array<i32>} : memref<1x2x256xf32, #tpu.memory_space<vmem>>, vector<1x2x256xf32>,
    return
  }
  func.func @transform_0(%arg0: i32, %arg1: i32) -> (i32, i32, i32) {
    %c1_i32 = arith.constant 1 : i32
    %0 = arith.muli %arg0, %c1_i32 : i32
    %1 = arith.addi %0, %arg1 : i32
    %c0_i32 = arith.constant 0 : i32
    %c0_i32_0 = arith.constant 0 : i32
    %c0_i32_1 = arith.constant 0 : i32
    return %c0_i32, %c0_i32_0, %1 : i32, i32, i32
  }
  func.func @transform_1(%arg0: i32, %arg1: i32) -> (i32, i32) {
    %c1_i32 = arith.constant 1 : i32
    %0 = arith.muli %arg0, %c1_i32 : i32
    %1 = arith.addi %0, %arg1 : i32
    %c0_i32 = arith.constant 0 : i32
    %c0_i32_0 = arith.constant 0 : i32
    return %c0_i32, %1 : i32, i32
  }
  func.func @transform_2(%arg0: i32, %arg1: i32) -> (i32, i32, i32, i32) {
    %c0_i32 = arith.constant 0 : i32
    %c0_i32_0 = arith.constant 0 : i32
    %c0_i32_1 = arith.constant 0 : i32
    %c0_i32_2 = arith.constant 0 : i32
    return %arg0, %c0_i32, %c0_i32_0, %c0_i32_1 : i32, i32, i32, i32
  }
  func.func @transform_3(%arg0: i32, %arg1: i32) -> (i32, i32, i32, i32) {
    %c0_i32 = arith.constant 0 : i32
    %c0_i32_0 = arith.constant 0 : i32
    %c0_i32_1 = arith.constant 0 : i32
    %c0_i32_2 = arith.constant 0 : i32
    return %arg0, %c0_i32, %c0_i32_0, %c0_i32_1 : i32, i32, i32, i32
  }
  func.func @transform_4(%arg0: i32, %arg1: i32) -> (i32, i32, i32, i32) {
    %c0_i32 = arith.constant 0 : i32
    %c0_i32_0 = arith.constant 0 : i32
    %c0_i32_1 = arith.constant 0 : i32
    %c0_i32_2 = arith.constant 0 : i32
    return %arg0, %c0_i32, %c0_i32_0, %c0_i32_1 : i32, i32, i32, i32
  }
  func.func @transform_5(%arg0: i32, %arg1: i32) -> (i32, i32, i32) {
    %c0_i32 = arith.constant 0 : i32
    %c0_i32_0 = arith.constant 0 : i32
    %c0_i32_1 = arith.constant 0 : i32
    return %arg0, %c0_i32, %c0_i32_0 : i32, i32, i32
  }
}

</mosaic_0001>

<llo_original>
// kernel: tpu_custom_call.1
$region0: #{tpu_custom_call.1}
  #allocation0 [shape = 'u32[]', space=smem, size = 0x4, offset = 0x4, fixed_abs, tag = 'smem constant byte address 0x4 - core index']
  #allocation1 [shape = 'u32[144,128]{1,0:T(1,128)}', space=vmem, size = 0x12000, scoped, tag = 'internal scratch']
  %s0 = inlined_call_operand.hbm [shape: f32[2,4,256], index: 0, kind: input, shape index: {}]
  %s1 = inlined_call_operand.vmem [shape: s8[2,256], index: 1, kind: input, shape index: {}]
  %s2 = inlined_call_operand.vmem [shape: f32[1,2,4,1], index: 2, kind: output, shape index: {0}]
  %s3 = inlined_call_operand.vmem [shape: f32[1,2,4,1], index: 3, kind: output, shape index: {1}]
  %s4 = inlined_call_operand.vmem [shape: f32[1,2,4,1], index: 4, kind: output, shape index: {2}]
  %s5 = inlined_call_operand.hbm [shape: f32[1,2,256], index: 5, kind: output, shape index: {3}]
  %6 = xla_tuple %s2, %s3, %s4, %s5
  %s7 = sld [smem:[#allocation0]]
  $region50: #{tpu_custom_call.1} parent=0
    _
  %s9 = ssub.s32 1, %s7
  %s10 = scalar_select 0, %s9, %s7
  $region1: #{tpu_custom_call.1} parent=0
    #allocation2 [shape = 'u8[8192]{0}', space=vmem, size = 0x2000, scoped, tag = 'input window, operand 0, single buffered']
    #allocation3 [shape = 's32[1]{0}', space=sflag, size = 0x4, scoped, tag = 'scoped memory for tpu_custom_call.1']
    #allocation4 [shape = 's32[1]{0}', space=sflag, size = 0x4, scoped, tag = 'scoped memory for tpu_custom_call.1']
    #allocation5 [shape = 'u8[2048]{0}', space=vmem, size = 0x800, scoped, tag = 'output window, operand 3, single buffered']
    %11 = vsyncpa [#allocation3], 0
    %12 = vsyncpa [#allocation4], 0
    // Predicated region
    $region2: #{tpu_custom_call.1} parent=1 // pred_check
      _
    $region3: #{tpu_custom_call.1} parent=1 // pred_check_branch
      %14 = sbr.rel (0) target = $region5
    $region4: #{tpu_custom_call.1} parent=1 // pred_region
      %s15 = sadd.s32 0, 0
      %s16 = smul.u32 2, %s15
      %s18 = ssub.s32 256, 256
      %19 = vsyncadd [#allocation3], %s18
      %s20 = smul.addr %s16, 64
      %s21 = scalar_lea.hbm %s0, %s20
      %s22 = sshll.u32 [#allocation2], 4
      %s23 = int_to_ptr.vmem [resolvable:$true] %s22
      %28 = dma.hbm_to_vmem [thread:$0]  %s21, 256, %s23, [#allocation3], 128, 128, 8
    $region5: #{tpu_custom_call.1} parent=1 // pred_fallthru
      _
    // Predicated region
    $region6: #{tpu_custom_call.1} parent=1 // pred_check
      _
    $region7: #{tpu_custom_call.1} parent=1 // pred_check_branch
      %30 = sbr.rel (0) target = $region9
    $region8: #{tpu_custom_call.1} parent=1 // pred_region
      %s31 = sadd.s32 0, 0
      %s32 = smul.u32 2, %s31
      %p33 = scmp.lt.s32.totalorder %s32, 1
      %s34 = scalar_select %p33, %s32, 1
      %s35 = scalar_lea.vmem %s1, %s34
      %s36 = sadd.s32 0, 0
      %s37 = smul.u32 2, %s36
    $region9: #{tpu_custom_call.1} parent=1 // pred_fallthru
      _
    // Predicated region
    $region10: #{tpu_custom_call.1} parent=1 // pred_check
      _
    $region11: #{tpu_custom_call.1} parent=1 // pred_check_branch
      %39 = sbr.rel (0) target = $region13
    $region12: #{tpu_custom_call.1} parent=1 // pred_region
      %40 = dma.done [#allocation3], 256
    $region13: #{tpu_custom_call.1} parent=1 // pred_fallthru
      _
    %s41 = sadd.s32 0, 0
    %s42 = smul.u32 2, %s41
    %p43 = scmp.lt.s32.totalorder %s42, 1
    %s44 = scalar_select %p43, %s42, 1
    %s45 = scalar_lea.vmem %s1, %s44
    %s46 = sadd.s32 0, 0
    %s47 = smul.u32 2, %s46
    %s48 = sadd.s32 0, 0
    %s49 = smul.u32 2, %s48
    %p50 = scmp.lt.s32.totalorder %s49, 1
    %s51 = scalar_select %p50, %s49, 1
    %s52 = scalar_lea.vmem %s1, %s51
    %s53 = sadd.s32 0, 0
    %s54 = smul.u32 2, %s53
    %p55 = scmp.eq.s32.totalorder 0, 0
    // Predicated region
    $region14: #{tpu_custom_call.1} parent=1 // pred_check
      %p56 = pneg %p55
    $region15: #{tpu_custom_call.1} parent=1 // pred_check_branch
      %58 = sbr.rel (%p56) target = $region17
    $region16: #{tpu_custom_call.1} parent=1 // pred_region
      %vm59 = vcmask 3072
      %60 = vst.msk [vmem:[%s2] sm:$0xf] %vm59, 0.0
      %61 = vst.msk [vmem:[%s2 + $0x4] sm:$0xf] %vm59, 0.0
      %62 = vst.msk [vmem:[%s3] sm:$0xf] %vm59, 0.0
      %63 = vst.msk [vmem:[%s3 + $0x4] sm:$0xf] %vm59, 0.0
      %64 = vst.msk [vmem:[%s4] sm:$0xf] %vm59, 0.0
      %65 = vst.msk [vmem:[%s4 + $0x4] sm:$0xf] %vm59, 0.0
      %66 = vst [vmem:[#allocation5] sm:$0xf] 0.0
    $region17: #{tpu_custom_call.1} parent=1 // pred_fallthru
      _
    %v67 = vld [vmem:[#allocation2] sm:$0xff]
    %v68 = vld [vmem:[#allocation2 + $0x8] sm:$0xff]
    %v69 = vld [vmem:[%s52] sm:$0x3]
    %v70 = vunpack.c.0.s8 %v69
    %v73 = vcombine.high %v67, %v67
    %v74 = vcombine.high %v68, %v68
    %vm77 = vcmask 1043456
    %v78 = vsel %vm77, %v67, -inf
    %v79 = vrot.slane %v78, 4
    %v80 = vmax.f32 %v78, %v79
    %v81 = vrot.slane %v80, 2
    %v82 = vmax.f32 %v80, %v81
    %v83 = vrot.slane %v82, 1
    %v84 = vmax.f32 %v82, %v83
    %v85 = vsel %vm77, %v73, -inf
    %v86 = vrot.slane %v85, 4
    %v87 = vmax.f32 %v85, %v86
    %v88 = vrot.slane %v87, 2
    %v89 = vmax.f32 %v87, %v88
    %v90 = vrot.slane %v89, 1
    %v91 = vmax.f32 %v89, %v90
    %v92 = vsel %vm77, %v68, -inf
    %v93 = vrot.slane %v92, 4
    %v94 = vmax.f32 %v92, %v93
    %v95 = vrot.slane %v94, 2
    %v96 = vmax.f32 %v94, %v95
    %v97 = vrot.slane %v96, 1
    %v98 = vmax.f32 %v96, %v97
    %v99 = vsel %vm77, %v74, -inf
    %v100 = vrot.slane %v99, 4
    %v101 = vmax.f32 %v99, %v100
    %v102 = vrot.slane %v101, 2
    %v103 = vmax.f32 %v101, %v102
    %v104 = vrot.slane %v103, 1
    %v105 = vmax.f32 %v103, %v104
    %v110 = vcombine.low %v84, %v91
    %v111 = vcombine.low %v98, %v105
    %v114 = vsub.f32 %v67, %v110
    %v115 = vsub.f32 %v68, %v111
    %v116 = vmul.f32 %v114, 1.442695
    %v117 = vpow.pop %v116
    %v118 = vmul.f32 %v115, 1.442695
    %v119 = vpow.pop %v118
    %v122 = vcombine.high %v117, %v117
    %v123 = vcombine.high %v119, %v119
    %v126 = vsel %vm77, %v117, 0.0
    %v127 = vrot.slane %v126, 4
    %v128 = vadd.f32 %v126, %v127
    %v129 = vrot.slane %v128, 2
    %v130 = vadd.f32 %v128, %v129
    %v131 = vrot.slane %v130, 1
    %v132 = vadd.f32 %v130, %v131
    %v133 = vsel %vm77, %v122, 0.0
    %v134 = vrot.slane %v133, 4
    %v135 = vadd.f32 %v133, %v134
    %v136 = vrot.slane %v135, 2
    %v137 = vadd.f32 %v135, %v136
    %v138 = vrot.slane %v137, 1
    %v139 = vadd.f32 %v137, %v138
    %v140 = vsel %vm77, %v119, 0.0
    %v141 = vrot.slane %v140, 4
    %v142 = vadd.f32 %v140, %v141
    %v143 = vrot.slane %v142, 2
    %v144 = vadd.f32 %v142, %v143
    %v145 = vrot.slane %v144, 1
    %v146 = vadd.f32 %v144, %v145
    %v147 = vsel %vm77, %v123, 0.0
    %v148 = vrot.slane %v147, 4
    %v149 = vadd.f32 %v147, %v148
    %v150 = vrot.slane %v149, 2
    %v151 = vadd.f32 %v149, %v150
    %v152 = vrot.slane %v151, 1
    %v153 = vadd.f32 %v151, %v152
    %v154 = vrcp.pop %v132
    %v155 = vrcp.pop %v139
    %v156 = vrcp.pop %v146
    %v157 = vrcp.pop %v153
    %v158 = vmul.f32 %v132, %v154
    %v159 = vmul.f32 %v139, %v155
    %v160 = vmul.f32 %v146, %v156
    %v161 = vmul.f32 %v153, %v157
    %v162 = vsub.f32 2.0, %v158
    %v163 = vsub.f32 2.0, %v159
    %v164 = vsub.f32 2.0, %v160
    %v165 = vsub.f32 2.0, %v161
    %v166 = vmul.f32 %v154, %v162
    %v167 = vmul.f32 %v155, %v163
    %v168 = vmul.f32 %v156, %v164
    %v169 = vmul.f32 %v157, %v165
    %v174 = vcombine.low %v166, %v167
    %v175 = vcombine.low %v168, %v169
    %v178 = vmul.f32 %v117, %v174
    %v179 = vmul.f32 %v119, %v175
    %v180 = vlaneseq
    %v181 = vshrl.u32 %v180, 7
    %v183 = vunpack.c.l.s4 1966171168
    %v184 = vunpack.c.0.s8 %v183
    %v185 = vlaneseq
    %v186 = vshrl.u32 %v185, 7
    %v187 = vsub.s32 %v184, %v186
    %v188 = vrot.slane %v70, %v187
    %v189 = vcombine.high %v188, %v188
    %v191 = vunpack.c.l.s4 1966171168
    %v192 = vunpack.c.0.s8 %v191
    %v193 = vlaneseq
    %v194 = vshrl.u32 %v193, 7
    %v195 = vsub.s32 %v192, %v194
    %v196 = vrot.slane %v188, %v195
    %v198 = vunpack.c.l.s4 1966171168
    %v199 = vunpack.c.0.s8 %v198
    %v200 = vlaneseq
    %v201 = vshrl.u32 %v200, 7
    %v202 = vsub.s32 %v199, %v201
    %v203 = vrot.slane %v189, %v202
    %v204 = vlaneseq
    %v205 = vshrl.u32 %v204, 7
    %v206 = vsub.s32 0, %v205
    %v207 = vrot.slane %v196, %v206
    %v208 = vlaneseq
    %v209 = vshrl.u32 %v208, 7
    %v210 = vsub.s32 1, %v209
    %v211 = vrot.slane %v196, %v210
    %v212 = vlaneseq
    %v213 = vshrl.u32 %v212, 7
    %v214 = vsub.s32 0, %v213
    %v215 = vrot.slane %v203, %v214
    %v216 = vlaneseq
    %v217 = vshrl.u32 %v216, 7
    %v218 = vsub.s32 1, %v217
    %v219 = vrot.slane %v203, %v218
    %vm220 = vcmp.eq.s32.totalorder %v181, %v207
    %vm221 = vcmp.eq.s32.totalorder %v181, %v211
    %vm222 = vcmp.eq.s32.totalorder %v181, %v215
    %vm223 = vcmp.eq.s32.totalorder %v181, %v219
    %v224 = vsel %vm220, %v67, 0.0
    %v225 = vsel %vm221, %v73, 0.0
    %v226 = vsel %vm222, %v68, 0.0
    %v227 = vsel %vm223, %v74, 0.0
    %v228 = vsel %vm77, %v224, 0.0
    %v229 = vrot.slane %v228, 4
    %v230 = vadd.f32 %v228, %v229
    %v231 = vrot.slane %v230, 2
    %v232 = vadd.f32 %v230, %v231
    %v233 = vrot.slane %v232, 1
    %v234 = vadd.f32 %v232, %v233
    %v235 = vsel %vm77, %v225, 0.0
    %v236 = vrot.slane %v235, 4
    %v237 = vadd.f32 %v235, %v236
    %v238 = vrot.slane %v237, 2
    %v239 = vadd.f32 %v237, %v238
    %v240 = vrot.slane %v239, 1
    %v241 = vadd.f32 %v239, %v240
    %v242 = vsel %vm77, %v226, 0.0
    %v243 = vrot.slane %v242, 4
    %v244 = vadd.f32 %v242, %v243
    %v245 = vrot.slane %v244, 2
    %v246 = vadd.f32 %v244, %v245
    %v247 = vrot.slane %v246, 1
    %v248 = vadd.f32 %v246, %v247
    %v249 = vsel %vm77, %v227, 0.0
    %v250 = vrot.slane %v249, 4
    %v251 = vadd.f32 %v249, %v250
    %v252 = vrot.slane %v251, 2
    %v253 = vadd.f32 %v251, %v252
    %v254 = vrot.slane %v253, 1
    %v255 = vadd.f32 %v253, %v254
    %v256 = vlog2.pop %v132
    %v257 = vmul.f32 %v256, 0.6931472
    %v258 = vlog2.pop %v139
    %v259 = vmul.f32 %v258, 0.6931472
    %v260 = vlog2.pop %v146
    %v261 = vmul.f32 %v260, 0.6931472
    %v262 = vlog2.pop %v153
    %v263 = vmul.f32 %v262, 0.6931472
    %v264 = vadd.f32 %v84, %v257
    %v265 = vadd.f32 %v91, %v259
    %v266 = vadd.f32 %v98, %v261
    %v267 = vadd.f32 %v105, %v263
    %v268 = vsub.f32 %v264, %v234
    %v269 = vsub.f32 %v265, %v241
    %v270 = vsub.f32 %v266, %v248
    %v271 = vsub.f32 %v267, %v255
    %v272 = vld [vmem:[%s2] sm:$0xf]
    %v273 = vld [vmem:[%s2 + $0x4] sm:$0xf]
    %v276 = vcombine.high %v178, %v178
    %v277 = vcombine.high %v179, %v179
    %v280 = vsel %vm220, %v178, 0.0
    %v281 = vsel %vm221, %v276, 0.0
    %v282 = vsel %vm222, %v179, 0.0
    %v283 = vsel %vm223, %v277, 0.0
    %v284 = vsel %vm77, %v280, 0.0
    %v285 = vsel %vm77, %v281, 0.0
    %v286 = vadd.f32 %v284, %v285
    %287 = vadd.xlane.f32.xlu0 %v286
    %v288 = vpop.xlane.xlu0 %287
    %v289 = vsel %vm77, %v282, 0.0
    %v290 = vsel %vm77, %v283, 0.0
    %v291 = vadd.f32 %v289, %v290
    %292 = vadd.xlane.f32.xlu0 %v291
    %v293 = vpop.xlane.xlu0 %292
    %v294 = vadd.f32 %v272, %v288
    %v295 = vadd.f32 %v273, %v293
    %vm296 = vcmask 3072
    %297 = vst.msk [vmem:[%s2] sm:$0xf] %vm296, %v294
    %298 = vst.msk [vmem:[%s2 + $0x4] sm:$0xf] %vm296, %v295
    %v299 = vld [vmem:[%s3] sm:$0xf]
    %v300 = vld [vmem:[%s3 + $0x4] sm:$0xf]
    %v301 = vsel %vm77, %v178, 0.0
    %v302 = vsel %vm77, %v276, 0.0
    %v303 = vadd.f32 %v301, %v302
    %304 = vadd.xlane.f32.xlu0 %v303
    %v305 = vpop.xlane.xlu0 %304
    %v306 = vsel %vm77, %v179, 0.0
    %v307 = vsel %vm77, %v277, 0.0
    %v308 = vadd.f32 %v306, %v307
    %309 = vadd.xlane.f32.xlu0 %v308
    %v310 = vpop.xlane.xlu0 %309
    %v311 = vadd.f32 %v299, %v305
    %v312 = vadd.f32 %v300, %v310
    %313 = vst.msk [vmem:[%s3] sm:$0xf] %vm296, %v311
    %314 = vst.msk [vmem:[%s3 + $0x4] sm:$0xf] %vm296, %v312
    %v315 = vld [vmem:[%s4] sm:$0xf]
    %v316 = vld [vmem:[%s4 + $0x4] sm:$0xf]
    %v317 = vsel %vm220, 1.0, 0.0
    %v318 = vsel %vm221, 1.0, 0.0
    %v319 = vsel %vm222, 1.0, 0.0
    %v320 = vsel %vm223, 1.0, 0.0
    %v321 = vsel %vm77, %v317, 0.0
    %v322 = vsel %vm77, %v318, 0.0
    %v323 = vadd.f32 %v321, %v322
    %324 = vadd.xlane.f32.xlu0 %v323
    %v325 = vpop.xlane.xlu0 %324
    %v326 = vsel %vm77, %v319, 0.0
    %v327 = vsel %vm77, %v320, 0.0
    %v328 = vadd.f32 %v326, %v327
    %329 = vadd.xlane.f32.xlu0 %v328
    %v330 = vpop.xlane.xlu0 %329
    %v331 = vadd.f32 %v315, %v325
    %v332 = vadd.f32 %v316, %v330
    %333 = vst.msk [vmem:[%s4] sm:$0xf] %vm296, %v331
    %334 = vst.msk [vmem:[%s4 + $0x4] sm:$0xf] %vm296, %v332
    %v335 = vld [vmem:[#allocation5] sm:$0xf]
    %v340 = vcombine.low %v268, %v269
    %v342 = vunpack.c.l.s4 1983009808
    %v343 = vunpack.c.0.s8 %v342
    %v344 = vlaneseq
    %v345 = vshrl.u32 %v344, 7
    %v346 = vsub.s32 %v343, %v345
    %v347 = vrot.slane %v340, %v346
    %v348 = vcombine.low %v270, %v271
    %v350 = vunpack.c.l.s4 1983009808
    %v351 = vunpack.c.0.s8 %v350
    %v352 = vlaneseq
    %v353 = vshrl.u32 %v352, 7
    %v354 = vsub.s32 %v351, %v353
    %v355 = vrot.slane %v348, %v354
    %vm356 = vcmask 1044484
    %v357 = vsel %vm356, %v347, %v347
    %vm358 = vcmask 1046534
    %v359 = vsel %vm358, %v347, %v357
    %v360 = vrot.slane %v355, 7
    %vm361 = vcmask 1041409
    %v362 = vsel %vm361, %v360, %v359
    %vm363 = vcmask 1043459
    %v364 = vsel %vm363, %v360, %v362
    %vm365 = vcmask 1045509
    %v366 = vsel %vm365, %v360, %v364
    %vm367 = vcmask 1047559
    %v368 = vsel %vm367, %v360, %v366
    %v370 = vadd.f32 %v335, %v368
    %371 = vst [vmem:[#allocation5] sm:$0xf] %v370
    // Predicated region
    $region18: #{tpu_custom_call.1} parent=1 // pred_check
      _
    $region19: #{tpu_custom_call.1} parent=1 // pred_check_branch
      %373 = sbr.rel (0) target = $region21
    $region20: #{tpu_custom_call.1} parent=1 // pred_region
      _
    $region21: #{tpu_custom_call.1} parent=1 // pred_fallthru
      _
    // Predicated region
    $region22: #{tpu_custom_call.1} parent=1 // pred_check
      _
    $region23: #{tpu_custom_call.1} parent=1 // pred_check_branch
      %375 = sbr.rel (0) target = $region25
    $region24: #{tpu_custom_call.1} parent=1 // pred_region
      _
    $region25: #{tpu_custom_call.1} parent=1 // pred_fallthru
      _
    // Predicated region
    $region26: #{tpu_custom_call.1} parent=1 // pred_check
      _
    $region27: #{tpu_custom_call.1} parent=1 // pred_check_branch
      %377 = sbr.rel (0) target = $region29
    $region28: #{tpu_custom_call.1} parent=1 // pred_region
      _
    $region29: #{tpu_custom_call.1} parent=1 // pred_fallthru
      _
    // Predicated region
    $region30: #{tpu_custom_call.1} parent=1 // pred_check
      _
    $region31: #{tpu_custom_call.1} parent=1 // pred_check_branch
      %379 = sbr.rel (0) target = $region33
    $region32: #{tpu_custom_call.1} parent=1 // pred_region
      %s381 = ssub.s32 64, 64
      %382 = vsyncadd [#allocation4], %s381
      %s384 = sshll.u32 [#allocation5], 4
      %s385 = int_to_ptr.vmem [resolvable:$true] %s384
      %387 = dma.vmem_to_hbm [thread:$0]  %s385, 64, %s5, [#allocation4]
    $region33: #{tpu_custom_call.1} parent=1 // pred_fallthru
      _
    // Predicated region
    $region34: #{tpu_custom_call.1} parent=1 // pred_check
      _
    $region35: #{tpu_custom_call.1} parent=1 // pred_check_branch
      %389 = sbr.rel (0) target = $region37
    $region36: #{tpu_custom_call.1} parent=1 // pred_region
      _
    $region37: #{tpu_custom_call.1} parent=1 // pred_fallthru
      _
    // Predicated region
    $region38: #{tpu_custom_call.1} parent=1 // pred_check
      _
    $region39: #{tpu_custom_call.1} parent=1 // pred_check_branch
      %391 = sbr.rel (0) target = $region41
    $region40: #{tpu_custom_call.1} parent=1 // pred_region
      _
    $region41: #{tpu_custom_call.1} parent=1 // pred_fallthru
      _
    // Predicated region
    $region42: #{tpu_custom_call.1} parent=1 // pred_check
      _
    $region43: #{tpu_custom_call.1} parent=1 // pred_check_branch
      %393 = sbr.rel (0) target = $region45
    $region44: #{tpu_custom_call.1} parent=1 // pred_region
      _
    $region45: #{tpu_custom_call.1} parent=1 // pred_fallthru
      _
    // Predicated region
    $region46: #{tpu_custom_call.1} parent=1 // pred_check
      _
    $region47: #{tpu_custom_call.1} parent=1 // pred_check_branch
      %395 = sbr.rel (0) target = $region49
    $region48: #{tpu_custom_call.1} parent=1 // pred_region
      %396 = dma.done [#allocation4], 64
    $region49: #{tpu_custom_call.1} parent=1 // pred_fallthru
      _
    %397 = vsyncpa [#allocation3], 1
    %398 = vsyncpa [#allocation4], 1

</llo_original>
